<compile_context>
chip_gen: v6e
topology: v6e:2x2x1
jax: 0.10.0
libtpu: 0.0.40
codegen_flags: <defaults>
</compile_context>

<pallas_src>
import jax
import jax.numpy as jnp
from jax.experimental import pallas as pl
from jax.experimental.pallas import tpu as pltpu

SOFTPLUS_BETA = 1.0
SOFTPLUS_THRESHOLD = 20.0          # nn.Softplus defaults

TARGET_BLOCK_BYTES = 4 * 1024 * 1024   # ~4 MiB per block buffer
VMEM_LIMIT_BYTES = 32 * 1024 * 1024    # in+out double-buffered 4 MiB blocks = 16 MiB


# ----------------------------------------------------------------------------
# Kernels
# ----------------------------------------------------------------------------
def _relu_kernel(x_ref, o_ref):
    # Fast path: the forward value of sp + (relu - sp) is relu(x) (<=1 ulp).
    x = x_ref[...]
    o_ref[...] = jnp.maximum(x, 0).astype(o_ref.dtype)


def _exact_kernel(x_ref, o_ref):
    # Faithful PyTorch expression: softplus (threshold trick), rounded to the
    # I/O dtype, then sp + (relu - sp) in that dtype.
    x = x_ref[...]
    xf = x.astype(jnp.float32)
    bx = xf if SOFTPLUS_BETA == 1.0 else SOFTPLUS_BETA * xf
    soft = jnp.log1p(jnp.exp(bx))
    if SOFTPLUS_BETA != 1.0:
        soft = soft * (1.0 / SOFTPLUS_BETA)
    # exp(bx) may overflow to inf on the *untaken* branch; log1p(inf)=inf is
    # then discarded by the where, so no NaN is produced.  Do not reorder.
    sp = jnp.where(bx > SOFTPLUS_THRESHOLD, xf, soft).astype(o_ref.dtype)
    relu_x = jnp.maximum(x, 0).astype(o_ref.dtype)
    o_ref[...] = sp + (relu_x - sp)


def _jnp_forward(x, exact):
    """Plain-jnp epilogue for the (<128-element) misaligned tail."""
    if not exact:
        return jnp.maximum(x, 0).astype(x.dtype)
    xf = x.astype(jnp.float32)
    bx = xf if SOFTPLUS_BETA == 1.0 else SOFTPLUS_BETA * xf
    soft = jnp.log1p(jnp.exp(bx))
    if SOFTPLUS_BETA != 1.0:
        soft = soft * (1.0 / SOFTPLUS_BETA)
    sp = jnp.where(bx > SOFTPLUS_THRESHOLD, xf, soft).astype(x.dtype)
    relu_x = jnp.maximum(x, 0).astype(x.dtype)
    return sp + (relu_x - sp)


# ----------------------------------------------------------------------------
# Tiling
# ----------------------------------------------------------------------------
def _choose_tile_rows(rows, lanes, itemsize, sublane_min):
    if rows <= sublane_min:
        return rows                      # single block == full array dims (allowed)
    # largest multiple of sublane_min that fits the per-buffer byte budget
    cap = (TARGET_BLOCK_BYTES // (lanes * itemsize)) // sublane_min * sublane_min
    cap = max(cap, sublane_min)
    tile = min(cap, (rows // sublane_min) * sublane_min)
    # keep >= 2 grid steps when rows allow it, so v7x's 2nd TensorCore has work
    if tile >= rows and rows >= 2 * sublane_min:
        half = -(-rows // 2)
        tile = min(tile, -(-half // sublane_min) * sublane_min)
    # prefer a tile that divides rows (final block stays a full, unmasked vst)
    if rows % tile:
        for cand in range(tile, sublane_min - 1, -sublane_min):
            if rows % cand == 0:
                if cand * 2 >= tile:     # don't shrink below half the target
                    tile = cand
                break
    return tile


def _pallas_2d(x2d, exact, donate):
    rows, lanes = x2d.shape
    itemsize = jnp.dtype(x2d.dtype).itemsize
    sublane_min = max(8, 32 // max(itemsize, 1))   # f32:8, bf16:16, int8:32
    tile_rows = _choose_tile_rows(rows, lanes, itemsize, sublane_min)
    grid = (pl.cdiv(rows, tile_rows),)

    kwargs = {}
    if donate:
        kwargs["input_output_aliases"] = {0: 0}

    return pl.pallas_call(
        _exact_kernel if exact else _relu_kernel,
        out_shape=jax.ShapeDtypeStruct((rows, lanes), x2d.dtype),
        grid=grid,
        in_specs=[pl.BlockSpec((tile_rows, lanes), lambda i: (i, 0))],
        out_specs=pl.BlockSpec((tile_rows, lanes), lambda i: (i, 0)),
        compiler_params=pltpu.CompilerParams(
            dimension_semantics=("parallel",),
            vmem_limit_bytes=VMEM_LIMIT_BYTES,
        ),
        **kwargs,
    )(x2d)


# ----------------------------------------------------------------------------
# Public wrapper
# ----------------------------------------------------------------------------
def relu_softplus_grad(x, *, exact=False, donate=False):
    """Forward of ReLUSoftPlusGrad. x: any-shape float array (e.g. NCHW)."""
    orig_shape = x.shape
    n = x.size
    if n == 0:
        return x
    x_flat = x.reshape(-1)               # free for a contiguous array

    # Fast path: flat size divides a lane-dense width (covers all typical
    # NCHW activation shapes). Zero extra HBM passes.
    if n % 128 == 0:
        lanes = 512 if n % 512 == 0 else (256 if n % 256 == 0 else 128)
        out2d = _pallas_2d(x_flat.reshape(n // lanes, lanes), exact, donate)
        return out2d.reshape(orig_shape)

    # Misaligned size (rare): kernel on the aligned prefix, tiny jnp epilogue
    # for the (<128-element) tail.  Never pad/copy the whole tensor.
    lanes = 128
    n_main = (n // lanes) * lanes
    if n_main == 0:
        return _jnp_forward(x_flat, exact).reshape(orig_shape)
    main = _pallas_2d(x_flat[:n_main].reshape(n_main // lanes, lanes), exact, donate)
    tail = _jnp_forward(x_flat[n_main:], exact)
    return jnp.concatenate([main.reshape(-1), tail]).reshape(orig_shape)


# ----------------------------------------------------------------------------
if __name__ == "__main__":
    key = jax.random.PRNGKey(0)
    # NCHW input, small shape
    x = jax.random.normal(key, (2, 4, 16, 16), dtype=jnp.float32) * 5.0
    ref = jnp.maximum(x, 0.0)

    # default (fast) path
    out = jax.block_until_ready(relu_softplus_grad(x))
    assert out.shape == x.shape and out.dtype == x.dtype
    assert jnp.allclose(out, ref, atol=1e-5), "fast path mismatch vs relu reference"

    # exact PyTorch-expression path
    out_exact = jax.block_until_ready(relu_softplus_grad(x, exact=True))
    assert jnp.allclose(out_exact, ref, atol=1e-5), "exact path mismatch"

    # misaligned flat size -> prefix kernel + jnp tail epilogue
    x_odd = jax.random.normal(jax.random.PRNGKey(1), (5, 131), dtype=jnp.float32) * 5.0
    out_odd = jax.block_until_ready(relu_softplus_grad(x_odd))
    assert jnp.allclose(out_odd, jnp.maximum(x_odd, 0.0), atol=1e-5), "misaligned path mismatch"

    print("KERNEL_OK")
</pallas_src>

<mosaic_0001>
module attributes {stable_mosaic.version = 11 : i64} {
  func.func @_relu_kernel(%arg0: i32, %arg1: memref<4x512xf32, #tpu.memory_space<vmem>>, %arg2: memref<4x512xf32, #tpu.memory_space<vmem>>) attributes {dimension_semantics = [#tpu.dimension_semantics<parallel>], iteration_bounds = array<i64: 1>, scalar_prefetch = 0 : i64, scratch_operands = 0 : i64, tpu.core_type = #tpu.core_type<tc>, window_params = [{transform_indices = @transform_0, window_bounds = array<i64: 4, 512>}, {transform_indices = @transform_1, window_bounds = array<i64: 4, 512>}]} {
    %c0 = arith.constant 0 : index
    %c0_0 = arith.constant 0 : index
    %0 = vector.load %arg1[%c0, %c0_0] : memref<4x512xf32, #tpu.memory_space<vmem>>, vector<4x512xf32>
    %cst = arith.constant 0.000000e+00 : f32
    %1 = vector.broadcast %cst : f32 to vector<4x512xf32>
    %2 = arith.maximumf %0, %1 : vector<4x512xf32>
    %c0_1 = arith.constant 0 : index
    %c0_2 = arith.constant 0 : index
    %3 = vector.load %arg2[%c0_1, %c0_2] : memref<4x512xf32, #tpu.memory_space<vmem>>, vector<4x512xf32>
    tpu.vector_store %arg2[%c0_1, %c0_2], %2 {strides = array<i32>} : memref<4x512xf32, #tpu.memory_space<vmem>>, vector<4x512xf32>,
    return
  }
  func.func @transform_0(%arg0: i32) -> (i32, i32) {
    %c0_i32 = arith.constant 0 : i32
    %c0_i32_0 = arith.constant 0 : i32
    return %arg0, %c0_i32 : i32, i32
  }
  func.func @transform_1(%arg0: i32) -> (i32, i32) {
    %c0_i32 = arith.constant 0 : i32
    %c0_i32_0 = arith.constant 0 : i32
    return %arg0, %c0_i32 : i32, i32
  }
}

</mosaic_0001>

<llo_original>
// kernel: tpu_custom_call.1
$region0: #{tpu_custom_call.1}
  #allocation0 [shape = 'u32[]', space=smem, size = 0x4, offset = 0x4, fixed_abs, tag = 'smem constant byte address 0x4 - core index']
  #allocation1 [shape = 'u32[144,128]{1,0:T(1,128)}', space=vmem, size = 0x12000, scoped, tag = 'internal scratch']
  %s0 = inlined_call_operand.hbm [shape: f32[4,512], index: 0, kind: input, shape index: {}]
  %s1 = inlined_call_operand.hbm [shape: f32[4,512], index: 1, kind: output, shape index: {}]
  %s2 = sld [smem:[#allocation0]]
  $region18: #{tpu_custom_call.1} parent=0
    _
  %s4 = ssub.s32 1, %s2
  %s5 = scalar_select 0, %s4, %s2
  $region1: #{tpu_custom_call.1} parent=0
    #allocation2 [shape = 'u8[8192]{0}', space=vmem, size = 0x2000, scoped, tag = 'input window, operand 0, single buffered']
    #allocation3 [shape = 's32[1]{0}', space=sflag, size = 0x4, scoped, tag = 'scoped memory for tpu_custom_call.1']
    #allocation4 [shape = 's32[1]{0}', space=sflag, size = 0x4, scoped, tag = 'scoped memory for tpu_custom_call.1']
    #allocation5 [shape = 'u8[8192]{0}', space=vmem, size = 0x2000, scoped, tag = 'output window, operand 0, single buffered']
    %6 = vsyncpa [#allocation3], 0
    %7 = vsyncpa [#allocation4], 0
    // Predicated region
    $region2: #{tpu_custom_call.1} parent=1 // pred_check
      _
    $region3: #{tpu_custom_call.1} parent=1 // pred_check_branch
      %9 = sbr.rel (0) target = $region5
    $region4: #{tpu_custom_call.1} parent=1 // pred_region
      %s11 = ssub.s32 256, 256
      %12 = vsyncadd [#allocation3], %s11
      %s14 = sshll.u32 [#allocation2], 4
      %s15 = int_to_ptr.vmem [resolvable:$true] %s14
      %17 = dma.hbm_to_vmem [thread:$0]  %s0, 256, %s15, [#allocation3]
    $region5: #{tpu_custom_call.1} parent=1 // pred_fallthru
      _
    // Predicated region
    $region6: #{tpu_custom_call.1} parent=1 // pred_check
      _
    $region7: #{tpu_custom_call.1} parent=1 // pred_check_branch
      %19 = sbr.rel (0) target = $region9
    $region8: #{tpu_custom_call.1} parent=1 // pred_region
      %20 = dma.done [#allocation3], 256
    $region9: #{tpu_custom_call.1} parent=1 // pred_fallthru
      _
    %v21 = vld [vmem:[#allocation2] sm:$0xff]
    %v22 = vld [vmem:[#allocation2 + $0x8] sm:$0xff]
    %v23 = vmax.f32 %v21, 0.0
    %v24 = vmax.f32 %v22, 0.0
    %25 = vst [vmem:[#allocation5] sm:$0xff] %v23
    %26 = vst [vmem:[#allocation5 + $0x8] sm:$0xff] %v24
    // Predicated region
    $region10: #{tpu_custom_call.1} parent=1 // pred_check
      _
    $region11: #{tpu_custom_call.1} parent=1 // pred_check_branch
      %28 = sbr.rel (0) target = $region13
    $region12: #{tpu_custom_call.1} parent=1 // pred_region
      %s30 = ssub.s32 256, 256
      %31 = vsyncadd [#allocation4], %s30
      %s33 = sshll.u32 [#allocation5], 4
      %s34 = int_to_ptr.vmem [resolvable:$true] %s33
      %36 = dma.vmem_to_hbm [thread:$0]  %s34, 256, %s1, [#allocation4]
    $region13: #{tpu_custom_call.1} parent=1 // pred_fallthru
      _
    // Predicated region
    $region14: #{tpu_custom_call.1} parent=1 // pred_check
      _
    $region15: #{tpu_custom_call.1} parent=1 // pred_check_branch
      %38 = sbr.rel (0) target = $region17
    $region16: #{tpu_custom_call.1} parent=1 // pred_region
      %39 = dma.done [#allocation4], 256
    $region17: #{tpu_custom_call.1} parent=1 // pred_fallthru
      _
    %40 = vsyncpa [#allocation3], 1
    %41 = vsyncpa [#allocation4], 1

</llo_original>
